<compile_context>
chip_gen: v5e
topology: v5e:2x2
jax: 0.10.0
libtpu: 0.0.40
codegen_flags: <defaults>
</compile_context>

<pallas_src>
import jax
import jax.numpy as jnp
from jax.experimental import pallas as pl
from jax.experimental.pallas import tpu as pltpu

HIDDEN = 400   # fixed by the module definition
LANE = 128


def _round_up(x, m):
    return ((x + m - 1) // m) * m


def _pad_axis(x, axis, target, value=0.0):
    pad = target - x.shape[axis]
    if pad <= 0:
        return x
    widths = [(0, 0)] * x.ndim
    widths[axis] = (0, pad)
    return jnp.pad(x, widths, constant_values=value)


def _choose_tb(batch):
    """Batch tile size: multiple of 16 (bf16 sublane packing), >=2 grid steps
    when the batch allows it (v7x megacore), capped at 512 rows (large blocks
    for single-TC v5e/v6e and to amortize per-grid-step overhead)."""
    if batch <= 16:
        return 16
    half = _round_up((batch + 1) // 2, 16)
    return min(512, half)


def _log_softmax_rows(logits):
    # Numerically stable log_softmax over the class (lane) axis.  Padded
    # classes carry bias -1e30 -> exp underflows to 0 and they do not perturb
    # the real lanes.
    m = jnp.max(logits, axis=1, keepdims=True)
    shifted = logits - m
    lse = jnp.log(jnp.sum(jnp.exp(shifted), axis=1, keepdims=True))
    return shifted - lse


def _receiver_fused_kernel(msg_ref, w_ref, b_ref, out_ref):
    # msg_ref: [TB, V] (bf16 or f32), w_ref: [V, CP] (same dtype), b_ref: [1, CP] f32
    logits = jnp.dot(msg_ref[...], w_ref[...],
                     preferred_element_type=jnp.float32) + b_ref[...]
    out_ref[...] = _log_softmax_rows(logits).astype(out_ref.dtype)


def _bias_logsoftmax_kernel(h_ref, b_ref, out_ref):
    # h_ref: [TB, CP] f32 (already-gathered fused-weight rows), b_ref: [1, CP]
    logits = h_ref[...] + b_ref[...]
    out_ref[...] = _log_softmax_rows(logits).astype(out_ref.dtype)


def prepare_receiver_params(emb, fc_w, fc_b):
    """One-time (per weight update) parameter prep.

    Folds the embedding and the Linear into a single [V, CP] weight (padded
    class dim, lane-dense) and pads the bias with -1e30 for the fake classes.
    Forward/inference-only: re-run whenever the weights change.
    """
    vocab_size, hidden = emb.shape
    n_classes = fc_w.shape[0]
    assert hidden == HIDDEN and fc_w.shape[1] == HIDDEN
    cp = _round_up(max(n_classes, LANE), LANE)

    w_fused = jnp.dot(emb.astype(jnp.float32), fc_w.astype(jnp.float32).T,
                      precision=jax.lax.Precision.HIGHEST)          # [V, C]
    w_fused = _pad_axis(w_fused, 1, cp)                              # [V, CP]
    bias = _pad_axis(fc_b.astype(jnp.float32), 0, cp, value=-1e30)
    bias = bias.reshape(1, cp)                                       # [1, CP]
    return {"w_fused": w_fused, "bias": bias,
            "n_classes": n_classes, "vocab_size": vocab_size}


def receiver_forward(message, params, use_bf16=True):
    """message: [B] int32 token ids OR [B, V] float relaxed one-hot.
    params: output of prepare_receiver_params.
    Returns [B, C] float32 log-probs."""
    w_fused = params["w_fused"]
    bias = params["bias"]
    n_classes = params["n_classes"]
    cp = w_fused.shape[1]

    if jnp.issubdtype(message.dtype, jnp.integer):
        # RelaxedEmbedding integer path: logits rows == rows of the fused
        # weight (no dense one-hot, no matmul).  Gather in XLA, then a tiny
        # Pallas kernel for bias + log_softmax.
        # Behavioral note: out-of-range ids clip here; torch Embedding errors.
        rows = jnp.take(w_fused, message, axis=0)                    # [B, CP] f32
        batch = rows.shape[0]
        tb = _choose_tb(batch)
        bp = _round_up(batch, tb)
        rows_p = _pad_axis(rows, 0, bp)
        out = pl.pallas_call(
            _bias_logsoftmax_kernel,
            out_shape=jax.ShapeDtypeStruct((bp, cp), jnp.float32),
            grid=(bp // tb,),
            in_specs=[pl.BlockSpec((tb, cp), lambda i: (i, 0)),
                      pl.BlockSpec((1, cp), lambda i: (0, 0))],
            out_specs=pl.BlockSpec((tb, cp), lambda i: (i, 0)),
            compiler_params=pltpu.CompilerParams(
                dimension_semantics=("parallel",)),
        )(rows_p, bias)
        return out[:batch, :n_classes]

    # Float (relaxed one-hot / Gumbel) path: one fused matmul on the MXU.
    compute_dtype = jnp.bfloat16 if use_bf16 else jnp.float32
    msg = message.astype(compute_dtype)
    w = w_fused.astype(compute_dtype)
    batch, vocab = msg.shape

    tb = _choose_tb(batch)
    bp = _round_up(batch, tb)
    msg_p = _pad_axis(msg, 0, bp)
    grid_b = bp // tb

    flops = 2 * bp * vocab * cp
    transcendentals = bp * (cp + 1)           # exp per class + log per row
    bytes_accessed = (msg_p.size * msg_p.dtype.itemsize
                      + w.size * w.dtype.itemsize
                      + bias.size * 4
                      + bp * cp * 4)

    # TODO(synk): for very large vocab (>~64K) add a V reduction grid axis
    # ("arbitrary", last) with an f32 accumulator instead of keeping the whole
    # [V, CP] fused weight resident in VMEM.
    out = pl.pallas_call(
        _receiver_fused_kernel,
        out_shape=jax.ShapeDtypeStruct((bp, cp), jnp.float32),
        grid=(grid_b,),
        in_specs=[pl.BlockSpec((tb, vocab), lambda i: (i, 0)),
                  pl.BlockSpec((vocab, cp), lambda i: (0, 0)),
                  pl.BlockSpec((1, cp), lambda i: (0, 0))],
        out_specs=pl.BlockSpec((tb, cp), lambda i: (i, 0)),
        compiler_params=pltpu.CompilerParams(
            dimension_semantics=("parallel",)),
        cost_estimate=pl.CostEstimate(
            flops=flops,
            transcendentals=transcendentals,
            bytes_accessed=bytes_accessed),
    )(msg_p, w, bias)

    return out[:batch, :n_classes]


if __name__ == "__main__":
    key = jax.random.PRNGKey(0)
    k_msg, k_emb, k_w, k_b, k_tok = jax.random.split(key, 5)

    batch = 8
    vocab_size = 32
    n_classes = 10

    # Deterministic synthetic "parameters".
    emb = jax.random.normal(k_emb, (vocab_size, HIDDEN), dtype=jnp.float32) * 0.1
    fc_w = jax.random.normal(k_w, (n_classes, HIDDEN), dtype=jnp.float32) * 0.05
    fc_b = jax.random.normal(k_b, (n_classes,), dtype=jnp.float32) * 0.01

    # One-time fold + pad (hoisted out of the per-call path).
    params = prepare_receiver_params(emb, fc_w, fc_b)

    # Relaxed (Gumbel-softmax-style) message: [B, vocab_size] probabilities.
    logits_msg = jax.random.normal(k_msg, (batch, vocab_size), dtype=jnp.float32)
    message = jax.nn.softmax(logits_msg, axis=-1)

    ref = jax.nn.log_softmax(message @ emb @ fc_w.T + fc_b, axis=1)

    # Default bf16-MXU path (f32 accumulation): tolerance sized for bf16 inputs.
    out_bf16 = jax.block_until_ready(receiver_forward(message, params))
    assert out_bf16.shape == (batch, n_classes)
    assert jnp.allclose(out_bf16, ref, atol=5e-2, rtol=5e-2)

    # f32 path: differs from the unfused reference only by reassociation.
    out_f32 = jax.block_until_ready(
        receiver_forward(message, params, use_bf16=False))
    assert jnp.allclose(out_f32, ref, atol=5e-3, rtol=5e-3)

    # Integer-token RelaxedEmbedding path (gather; no one-hot, no matmul).
    tok = jax.random.randint(k_tok, (batch,), 0, vocab_size)
    out_tok = jax.block_until_ready(receiver_forward(tok, params))
    ref_tok = jax.nn.log_softmax(emb[tok] @ fc_w.T + fc_b, axis=1)
    assert jnp.allclose(out_tok, ref_tok, atol=5e-3, rtol=5e-3)

    print("KERNEL_OK")
</pallas_src>

<mosaic_0001>
module attributes {stable_mosaic.version = 11 : i64} {
  func.func @_receiver_fused_kernel(%arg0: i32, %arg1: memref<16x32xbf16, #tpu.memory_space<vmem>>, %arg2: memref<32x128xbf16, #tpu.memory_space<vmem>>, %arg3: memref<1x128xf32, #tpu.memory_space<vmem>>, %arg4: memref<16x128xf32, #tpu.memory_space<vmem>>) attributes {dimension_semantics = [#tpu.dimension_semantics<parallel>], iteration_bounds = array<i64: 1>, scalar_prefetch = 0 : i64, scratch_operands = 0 : i64, tpu.core_type = #tpu.core_type<tc>, window_params = [{transform_indices = @transform_0, window_bounds = array<i64: 16, 32>}, {pipeline_mode = #tpu.pipeline_mode<synchronous>, transform_indices = @transform_1, window_bounds = array<i64: 32, 128>}, {pipeline_mode = #tpu.pipeline_mode<synchronous>, transform_indices = @transform_2, window_bounds = array<i64: 1, 128>}, {transform_indices = @transform_3, window_bounds = array<i64: 16, 128>}]} {
    %c0 = arith.constant 0 : index
    %c0_0 = arith.constant 0 : index
    %0 = vector.load %arg1[%c0, %c0_0] : memref<16x32xbf16, #tpu.memory_space<vmem>>, vector<16x32xbf16>
    %c0_1 = arith.constant 0 : index
    %c0_2 = arith.constant 0 : index
    %1 = vector.load %arg2[%c0_1, %c0_2] : memref<32x128xbf16, #tpu.memory_space<vmem>>, vector<32x128xbf16>
    %cst = arith.constant dense<0.000000e+00> : vector<16x128xf32>
    %2 = tpu.matmul %0, %1, %cst {dimension_numbers = #tpu.dot_dimension_numbers<[1], [0], [0], [1], [0, 0, 1, 1], [], []>} : vector<16x32xbf16>, vector<32x128xbf16>, vector<16x128xf32> -> vector<16x128xf32>
    %c0_3 = arith.constant 0 : index
    %c0_4 = arith.constant 0 : index
    %3 = vector.load %arg3[%c0_3, %c0_4] : memref<1x128xf32, #tpu.memory_space<vmem>>, vector<1x128xf32>
    %4 = vector.broadcast %3 : vector<1x128xf32> to vector<16x128xf32>
    %5 = arith.addf %2, %4 : vector<16x128xf32>
    %cst_5 = arith.constant dense<0xFF800000> : vector<16xf32>
    %6 = vector.multi_reduction <maximumf>, %5, %cst_5 [1] : vector<16x128xf32> to vector<16xf32>
    %7 = vector.shape_cast %6 : vector<16xf32> to vector<16x1xf32>
    %8 = vector.broadcast %7 : vector<16x1xf32> to vector<16x128xf32>
    %9 = arith.subf %5, %8 : vector<16x128xf32>
    %10 = math.exp %9 : vector<16x128xf32>
    %cst_6 = arith.constant dense<0.000000e+00> : vector<16xf32>
    %11 = vector.multi_reduction <add>, %10, %cst_6 [1] : vector<16x128xf32> to vector<16xf32>
    %12 = vector.shape_cast %11 : vector<16xf32> to vector<16x1xf32>
    %13 = math.log %12 : vector<16x1xf32>
    %14 = vector.broadcast %13 : vector<16x1xf32> to vector<16x128xf32>
    %15 = arith.subf %9, %14 : vector<16x128xf32>
    %c0_7 = arith.constant 0 : index
    %c0_8 = arith.constant 0 : index
    %16 = vector.load %arg4[%c0_7, %c0_8] : memref<16x128xf32, #tpu.memory_space<vmem>>, vector<16x128xf32>
    tpu.vector_store %arg4[%c0_7, %c0_8], %15 {strides = array<i32>} : memref<16x128xf32, #tpu.memory_space<vmem>>, vector<16x128xf32>,
    return
  }
  func.func @transform_0(%arg0: i32) -> (i32, i32) {
    %c0_i32 = arith.constant 0 : i32
    %c0_i32_0 = arith.constant 0 : i32
    return %arg0, %c0_i32 : i32, i32
  }
  func.func @transform_1(%arg0: i32) -> (i32, i32) {
    %c0_i32 = arith.constant 0 : i32
    %c0_i32_0 = arith.constant 0 : i32
    %c0_i32_1 = arith.constant 0 : i32
    return %c0_i32, %c0_i32_0 : i32, i32
  }
  func.func @transform_2(%arg0: i32) -> (i32, i32) {
    %c0_i32 = arith.constant 0 : i32
    %c0_i32_0 = arith.constant 0 : i32
    %c0_i32_1 = arith.constant 0 : i32
    return %c0_i32, %c0_i32_0 : i32, i32
  }
  func.func @transform_3(%arg0: i32) -> (i32, i32) {
    %c0_i32 = arith.constant 0 : i32
    %c0_i32_0 = arith.constant 0 : i32
    return %arg0, %c0_i32 : i32, i32
  }
}

</mosaic_0001>

<llo_original>
// kernel: tpu_custom_call.1
$region0: #{tpu_custom_call.1}
  #allocation0 [shape = 'u32[]', space=smem, size = 0x4, offset = 0x4, fixed_abs, tag = 'smem constant byte address 0x4 - core index']
  #allocation1 [shape = 'u32[72,128]{1,0:T(1,128)}', space=vmem, size = 0x9000, scoped, tag = 'internal scratch']
  %s0 = inlined_call_operand.hbm [shape: bf16[16,32], index: 0, kind: input, shape index: {}]
  %s1 = inlined_call_operand.hbm [shape: bf16[32,128], index: 1, kind: input, shape index: {}]
  %s2 = inlined_call_operand.vmem [shape: f32[1,128], index: 2, kind: input, shape index: {}]
  %s3 = inlined_call_operand.hbm [shape: f32[16,128], index: 3, kind: output, shape index: {}]
  %s4 = sld [smem:[#allocation0]]
  $region30: #{tpu_custom_call.1} parent=0
    _
  %s6 = ssub.s32 1, %s4
  %s7 = scalar_select 0, %s6, %s4
  $region1: #{tpu_custom_call.1} parent=0
    #allocation2 [shape = 'u8[4096]{0}', space=vmem, size = 0x1000, scoped, tag = 'input window, operand 0, single buffered']
    #allocation3 [shape = 's32[1]{0}', space=sflag, size = 0x4, scoped, tag = 'scoped memory for tpu_custom_call.1']
    #allocation4 [shape = 's32[1]{0}', space=sflag, size = 0x4, scoped, tag = 'scoped memory for tpu_custom_call.1']
    #allocation5 [shape = 'u8[8192]{0}', space=vmem, size = 0x2000, scoped, tag = 'input window, operand 1, single buffered']
    #allocation6 [shape = 's32[1]{0}', space=sflag, size = 0x4, scoped, tag = 'scoped memory for tpu_custom_call.1']
    #allocation7 [shape = 'u8[8192]{0}', space=vmem, size = 0x2000, scoped, tag = 'output window, operand 0, single buffered']
    %8 = vsyncpa [#allocation3], 0
    %9 = vsyncpa [#allocation6], 0
    %10 = vsyncpa [#allocation4], 0
    // Predicated region
    $region2: #{tpu_custom_call.1} parent=1 // pred_check
      _
    $region3: #{tpu_custom_call.1} parent=1 // pred_check_branch
      %12 = sbr.rel (0) target = $region5
    $region4: #{tpu_custom_call.1} parent=1 // pred_region
      %14 = vsyncadd [#allocation3], 0
      %s15 = sshll.u32 %s0, 4
      %s16 = int_to_ptr.hbm [resolvable:$true] %s15
      %s17 = sshll.u32 [#allocation2], 4
      %s18 = int_to_ptr.vmem [resolvable:$true] %s17
      %23 = dma.hbm_to_vmem [thread:$0]  %s16, 128, %s18, [#allocation3], 64, 64, 4
    $region5: #{tpu_custom_call.1} parent=1 // pred_fallthru
      _
    // Predicated region
    $region6: #{tpu_custom_call.1} parent=1 // pred_check
      _
    $region7: #{tpu_custom_call.1} parent=1 // pred_check_branch
      %25 = sbr.rel (0) target = $region9
    $region8: #{tpu_custom_call.1} parent=1 // pred_region
      %27 = vsyncadd [#allocation6], 0
      %s28 = sshll.u32 %s1, 4
      %s29 = int_to_ptr.hbm [resolvable:$true] %s28
      %s30 = sshll.u32 [#allocation5], 4
      %s31 = int_to_ptr.vmem [resolvable:$true] %s30
      %36 = dma.hbm_to_vmem [thread:$0]  %s29, 256, %s31, [#allocation6], 64, 64, 4
    $region9: #{tpu_custom_call.1} parent=1 // pred_fallthru
      _
    // Predicated region
    $region10: #{tpu_custom_call.1} parent=1 // pred_check
      _
    $region11: #{tpu_custom_call.1} parent=1 // pred_check_branch
      %38 = sbr.rel (0) target = $region13
    $region12: #{tpu_custom_call.1} parent=1 // pred_region
      _
    $region13: #{tpu_custom_call.1} parent=1 // pred_fallthru
      _
    // Predicated region
    $region14: #{tpu_custom_call.1} parent=1 // pred_check
      _
    $region15: #{tpu_custom_call.1} parent=1 // pred_check_branch
      %40 = sbr.rel (0) target = $region17
    $region16: #{tpu_custom_call.1} parent=1 // pred_region
      %42 = dma.done [#allocation3], 128
    $region17: #{tpu_custom_call.1} parent=1 // pred_fallthru
      _
    // Predicated region
    $region18: #{tpu_custom_call.1} parent=1 // pred_check
      _
    $region19: #{tpu_custom_call.1} parent=1 // pred_check_branch
      %44 = sbr.rel (0) target = $region21
    $region20: #{tpu_custom_call.1} parent=1 // pred_region
      %46 = dma.done [#allocation6], 256
    $region21: #{tpu_custom_call.1} parent=1 // pred_fallthru
      _
    %v48 = vld [vmem:[#allocation2] sm:$0xf]
    %v49 = vld [vmem:[#allocation2 + $0x4] sm:$0xf]
    %v50 = vld [vmem:[#allocation5] sm:$0xf]
    %v51 = vld [vmem:[#allocation5 + $0x4] sm:$0xf]
    %v52 = vld [vmem:[#allocation5 + $0x8] sm:$0xf]
    %v53 = vld [vmem:[#allocation5 + $0xc] sm:$0xf]
    %v54 = vld [vmem:[%s2] sm:$0x1]
    %v56 = vperm.slane %v54, 0
    %v60 = vunpack.c.l.b16 %v48
    %v61 = vunpack.c.l.b16 %v49
    %v62 = vpack.c.b16 %v61, %v60
    %v67 = vunpack.c.l.b16 %v50
    %v68 = vunpack.c.l.b16 %v51
    %v69 = vunpack.c.l.b16 %v52
    %v70 = vunpack.c.l.b16 %v53
    %v71 = vpack.c.b16 %v68, %v67
    %v72 = vpack.c.b16 %v70, %v69
    %vm75 = vcmask 261120
    %v77 = vsel %vm75, %v62, 0
    %79 = vmatpush.bf16.msra.mxu0 0
    %80 = vmatpush.bf16.msra.mxu0 0
    %81 = vmatpush.bf16.msra.mxu0 0
    %82 = vmatpush.bf16.msra.mxu0 0
    %83 = vmatpush.bf16.msra.mxu0 0
    %84 = vmatpush.bf16.msra.mxu0 0
    %85 = vmatpush.bf16.msra.mxu0 %v72
    %86 = vmatpush.bf16.msra.mxu0 %v71
    %87 = vmatmul.bf16.gmra.mxu0 %v77
    %v88 = vpop.f32.mrf.mxu0
    %v89 = vadd.f32 %v56, %v88
    %v90 = vpop.f32.mrf.mxu0
    %v91 = vadd.f32 %v56, %v90
    %92 = vdwg.mxu0
    %93 = vmax.xlane.f32.xlu0 %v89
    %v94 = vpop.xlane.xlu0 %93
    %95 = vmax.xlane.f32.xlu0 %v91
    %v96 = vpop.xlane.xlu0 %95
    %v97 = vsub.f32 %v89, %v94
    %v98 = vsub.f32 %v91, %v96
    %v99 = vmul.f32 %v97, 1.442695
    %v100 = vpow.pop %v99
    %v101 = vmul.f32 %v98, 1.442695
    %v102 = vpow.pop %v101
    %103 = vadd.xlane.f32.xlu0 %v100
    %v104 = vpop.xlane.xlu0 %103
    %105 = vadd.xlane.f32.xlu0 %v102
    %v106 = vpop.xlane.xlu0 %105
    %v107 = vlog2.pop %v104
    %v108 = vmul.f32 %v107, 0.6931472
    %v109 = vlog2.pop %v106
    %v110 = vmul.f32 %v109, 0.6931472
    %v111 = vsub.f32 %v97, %v108
    %v112 = vsub.f32 %v98, %v110
    %113 = vst [vmem:[#allocation7] sm:$0xff] %v111
    %114 = vst [vmem:[#allocation7 + $0x8] sm:$0xff] %v112
    // Predicated region
    $region22: #{tpu_custom_call.1} parent=1 // pred_check
      _
    $region23: #{tpu_custom_call.1} parent=1 // pred_check_branch
      %116 = sbr.rel (0) target = $region25
    $region24: #{tpu_custom_call.1} parent=1 // pred_region
      %118 = vsyncadd [#allocation4], 0
      %s119 = sshll.u32 [#allocation7], 4
      %s120 = int_to_ptr.vmem [resolvable:$true] %s119
      %s121 = sshll.u32 %s3, 4
      %s122 = int_to_ptr.hbm [resolvable:$true] %s121
      %127 = dma.vmem_to_hbm [thread:$0]  %s120, 256, %s122, [#allocation4], 128, 128, 8
    $region25: #{tpu_custom_call.1} parent=1 // pred_fallthru
      _
    // Predicated region
    $region26: #{tpu_custom_call.1} parent=1 // pred_check
      _
    $region27: #{tpu_custom_call.1} parent=1 // pred_check_branch
      %129 = sbr.rel (0) target = $region29
    $region28: #{tpu_custom_call.1} parent=1 // pred_region
      %131 = dma.done [#allocation4], 256
    $region29: #{tpu_custom_call.1} parent=1 // pred_fallthru
      _
    %132 = vsyncpa [#allocation3], 1
    %133 = vsyncpa [#allocation6], 1
    %134 = vsyncpa [#allocation4], 1

</llo_original>
